<compile_context>
chip_gen: v6e
topology: v6e:2x2x1
jax: 0.10.0
libtpu: 0.0.40
codegen_flags: <defaults>
</compile_context>

<pallas_src>
import jax
import jax.numpy as jnp
from jax.experimental import pallas as pl
from jax.experimental.pallas import tpu as pltpu


def rnn_kernel(x_ref,                       # (T, B, I)   bf16, time-major
               wih0_ref, whh0_ref, b0_ref,  # layer 0: (I,H) bf16, (H,H) bf16, (1,H) f32
               wih1_ref, whh1_ref, b1_ref,  # layer 1: (H,H) bf16, (H,H) bf16, (1,H) f32
               wfc_ref, bfc_ref,            # fc:      (H,C) bf16, (1,C) f32
               out_ref):                    # (B, C) f32
    T, B, I = x_ref.shape
    H = whh0_ref.shape[0]

    whh0 = whh0_ref[...]
    whh1 = whh1_ref[...]
    b0 = b0_ref[...]          # (1, H) f32 (bih + bhh, pre-summed in wrapper)
    b1 = b1_ref[...]

    # ---- Layer 0: input projection for ALL timesteps as ONE matmul (bias folded) ----
    x_all = x_ref[...].reshape(T * B, I)                                   # bf16
    x0 = jnp.dot(x_all, wih0_ref[...],
                 preferred_element_type=jnp.float32) + b0                  # (T*B, H) f32

    # ---- Layer 0 recurrence: h0 = tanh(X0[t] + h0 @ Whh0) ----
    h0 = jnp.zeros((B, H), jnp.float32)
    outs0 = []
    for t in range(T):                                                     # T small: static unroll
        pre = x0[t * B:(t + 1) * B, :] + jnp.dot(
            h0.astype(jnp.bfloat16), whh0, preferred_element_type=jnp.float32)
        h0 = jnp.tanh(pre)
        outs0.append(h0)

    # ---- Layer 1: input projection over the full layer-0 output sequence ----
    h0_seq = jnp.concatenate(outs0, axis=0).astype(jnp.bfloat16)           # (T*B, H)
    x1 = jnp.dot(h0_seq, wih1_ref[...],
                 preferred_element_type=jnp.float32) + b1                  # (T*B, H) f32

    # ---- Layer 1 recurrence ----
    h1 = jnp.zeros((B, H), jnp.float32)
    for t in range(T):
        h1 = jnp.tanh(x1[t * B:(t + 1) * B, :] + jnp.dot(
            h1.astype(jnp.bfloat16), whh1, preferred_element_type=jnp.float32))

    # ---- fc(out[:, -1, :]) ----
    out_ref[...] = (jnp.dot(h1.astype(jnp.bfloat16), wfc_ref[...],
                            preferred_element_type=jnp.float32)
                    + bfc_ref[...])


def rnn_forward(x, params):
    B, T, I = x.shape
    H = params["whh0"].shape[0]
    C = params["wfc"].shape[0]

    # Glue: time-major layout + bf16 MXU operands + pre-transposed weights +
    # pre-summed biases (all done once, outside the kernel).
    x_tm = jnp.transpose(x, (1, 0, 2)).astype(jnp.bfloat16)                # (T, B, I)
    bf = lambda w: w.astype(jnp.bfloat16)
    args = (
        x_tm,
        bf(params["wih0"].T), bf(params["whh0"].T),
        (params["bih0"] + params["bhh0"]).reshape(1, H).astype(jnp.float32),
        bf(params["wih1"].T), bf(params["whh1"].T),
        (params["bih1"] + params["bhh1"]).reshape(1, H).astype(jnp.float32),
        bf(params["wfc"].T), params["bfc"].reshape(1, C).astype(jnp.float32),
    )
    vmem = pl.BlockSpec(memory_space=pltpu.MemorySpace.VMEM)
    return pl.pallas_call(
        rnn_kernel,
        out_shape=jax.ShapeDtypeStruct((B, C), jnp.float32),
        in_specs=[vmem] * len(args),
        out_specs=vmem,
    )(*args)


def make_params(key, input_size, hidden_size, num_classes):
    """Deterministic init mimicking PyTorch's U(-1/sqrt(H), 1/sqrt(H))."""
    ks = jax.random.split(key, 11)
    k = 1.0 / jnp.sqrt(hidden_size)
    u = lambda kk, shape: jax.random.uniform(kk, shape, jnp.float32, -k, k)
    return {
        "wih0": u(ks[0], (hidden_size, input_size)),
        "whh0": u(ks[1], (hidden_size, hidden_size)),
        "bih0": u(ks[2], (hidden_size,)),
        "bhh0": u(ks[3], (hidden_size,)),
        "wih1": u(ks[4], (hidden_size, hidden_size)),
        "whh1": u(ks[5], (hidden_size, hidden_size)),
        "bih1": u(ks[6], (hidden_size,)),
        "bhh1": u(ks[7], (hidden_size,)),
        "wfc":  u(ks[8], (num_classes, hidden_size)),
        "bfc":  u(ks[9], (num_classes,)),
    }


def rnn_reference(x, p):
    """Pure-JAX f32 reference matching PyTorch nn.RNN(tanh, batch_first) + Linear."""
    B, T, _ = x.shape
    H = p["whh0"].shape[0]
    h0 = jnp.zeros((B, H), jnp.float32)
    outs0 = []
    for t in range(T):
        h0 = jnp.tanh(x[:, t, :] @ p["wih0"].T + p["bih0"] + h0 @ p["whh0"].T + p["bhh0"])
        outs0.append(h0)
    h1 = jnp.zeros((B, H), jnp.float32)
    for t in range(T):
        h1 = jnp.tanh(outs0[t] @ p["wih1"].T + p["bih1"] + h1 @ p["whh1"].T + p["bhh1"])
    return h1 @ p["wfc"].T + p["bfc"]


if __name__ == "__main__":
    batch, seq, input_size, hidden_size, num_classes = 8, 8, 16, 32, 4
    num_layers = 2  # statically baked into the kernel (two stacked RNN layers)

    key = jax.random.PRNGKey(0)
    kx, kp = jax.random.split(key)
    x = jax.random.normal(kx, (batch, seq, input_size), jnp.float32)
    params = make_params(kp, input_size, hidden_size, num_classes)

    out = rnn_forward(x, params)
    out = jax.block_until_ready(out)

    ref = rnn_reference(x, params)
    assert out.shape == (batch, num_classes)
    # bf16 MXU operands (f32 accumulation) -> loosened tolerance per review.
    assert jnp.allclose(out, ref, atol=2e-2, rtol=2e-2)
    print("KERNEL_OK")
</pallas_src>

<mosaic_0001>
module attributes {stable_mosaic.version = 11 : i64} {
  func.func @rnn_kernel(%arg0: memref<8x8x16xbf16, #tpu.memory_space<vmem>>, %arg1: memref<16x32xbf16, #tpu.memory_space<vmem>>, %arg2: memref<32x32xbf16, #tpu.memory_space<vmem>>, %arg3: memref<1x32xf32, #tpu.memory_space<vmem>>, %arg4: memref<32x32xbf16, #tpu.memory_space<vmem>>, %arg5: memref<32x32xbf16, #tpu.memory_space<vmem>>, %arg6: memref<1x32xf32, #tpu.memory_space<vmem>>, %arg7: memref<32x4xbf16, #tpu.memory_space<vmem>>, %arg8: memref<1x4xf32, #tpu.memory_space<vmem>>, %arg9: memref<8x4xf32, #tpu.memory_space<vmem>>) attributes {dimension_semantics = [], scalar_prefetch = 0 : i64, scratch_operands = 0 : i64, tpu.core_type = #tpu.core_type<tc>} {
    %c0 = arith.constant 0 : index
    %c0_0 = arith.constant 0 : index
    %0 = vector.load %arg2[%c0, %c0_0] : memref<32x32xbf16, #tpu.memory_space<vmem>>, vector<32x32xbf16>
    %c0_1 = arith.constant 0 : index
    %c0_2 = arith.constant 0 : index
    %1 = vector.load %arg5[%c0_1, %c0_2] : memref<32x32xbf16, #tpu.memory_space<vmem>>, vector<32x32xbf16>
    %c0_3 = arith.constant 0 : index
    %c0_4 = arith.constant 0 : index
    %2 = vector.load %arg3[%c0_3, %c0_4] : memref<1x32xf32, #tpu.memory_space<vmem>>, vector<1x32xf32>
    %c0_5 = arith.constant 0 : index
    %c0_6 = arith.constant 0 : index
    %3 = vector.load %arg6[%c0_5, %c0_6] : memref<1x32xf32, #tpu.memory_space<vmem>>, vector<1x32xf32>
    %c0_7 = arith.constant 0 : index
    %c0_8 = arith.constant 0 : index
    %c0_9 = arith.constant 0 : index
    %4 = vector.load %arg0[%c0_7, %c0_8, %c0_9] : memref<8x8x16xbf16, #tpu.memory_space<vmem>>, vector<8x8x16xbf16>
    %5 = vector.shape_cast %4 : vector<8x8x16xbf16> to vector<64x16xbf16>
    %c0_10 = arith.constant 0 : index
    %c0_11 = arith.constant 0 : index
    %6 = vector.load %arg1[%c0_10, %c0_11] : memref<16x32xbf16, #tpu.memory_space<vmem>>, vector<16x32xbf16>
    %cst = arith.constant dense<0.000000e+00> : vector<64x32xf32>
    %7 = tpu.matmul %5, %6, %cst {dimension_numbers = #tpu.dot_dimension_numbers<[1], [0], [0], [1], [0, 0, 1, 1], [], []>} : vector<64x16xbf16>, vector<16x32xbf16>, vector<64x32xf32> -> vector<64x32xf32>
    %8 = vector.broadcast %2 : vector<1x32xf32> to vector<64x32xf32>
    %9 = arith.addf %7, %8 : vector<64x32xf32>
    %cst_12 = arith.constant 0.000000e+00 : f32
    %10 = vector.broadcast %cst_12 : f32 to vector<8x32xf32>
    %11 = vector.extract_strided_slice %9 {offsets = [0, 0], sizes = [8, 32], strides = [1, 1]} : vector<64x32xf32> to vector<8x32xf32>
    %12 = arith.truncf %10 : vector<8x32xf32> to vector<8x32xbf16>
    %cst_13 = arith.constant dense<0.000000e+00> : vector<8x32xf32>
    %13 = tpu.matmul %12, %0, %cst_13 {dimension_numbers = #tpu.dot_dimension_numbers<[1], [0], [0], [1], [0, 0, 1, 1], [], []>} : vector<8x32xbf16>, vector<32x32xbf16>, vector<8x32xf32> -> vector<8x32xf32>
    %14 = arith.addf %11, %13 : vector<8x32xf32>
    %15 = math.tanh %14 : vector<8x32xf32>
    %16 = vector.extract_strided_slice %9 {offsets = [8, 0], sizes = [8, 32], strides = [1, 1]} : vector<64x32xf32> to vector<8x32xf32>
    %17 = arith.truncf %15 : vector<8x32xf32> to vector<8x32xbf16>
    %cst_14 = arith.constant dense<0.000000e+00> : vector<8x32xf32>
    %18 = tpu.matmul %17, %0, %cst_14 {dimension_numbers = #tpu.dot_dimension_numbers<[1], [0], [0], [1], [0, 0, 1, 1], [], []>} : vector<8x32xbf16>, vector<32x32xbf16>, vector<8x32xf32> -> vector<8x32xf32>
    %19 = arith.addf %16, %18 : vector<8x32xf32>
    %20 = math.tanh %19 : vector<8x32xf32>
    %21 = vector.extract_strided_slice %9 {offsets = [16, 0], sizes = [8, 32], strides = [1, 1]} : vector<64x32xf32> to vector<8x32xf32>
    %22 = arith.truncf %20 : vector<8x32xf32> to vector<8x32xbf16>
    %cst_15 = arith.constant dense<0.000000e+00> : vector<8x32xf32>
    %23 = tpu.matmul %22, %0, %cst_15 {dimension_numbers = #tpu.dot_dimension_numbers<[1], [0], [0], [1], [0, 0, 1, 1], [], []>} : vector<8x32xbf16>, vector<32x32xbf16>, vector<8x32xf32> -> vector<8x32xf32>
    %24 = arith.addf %21, %23 : vector<8x32xf32>
    %25 = math.tanh %24 : vector<8x32xf32>
    %26 = vector.extract_strided_slice %9 {offsets = [24, 0], sizes = [8, 32], strides = [1, 1]} : vector<64x32xf32> to vector<8x32xf32>
    %27 = arith.truncf %25 : vector<8x32xf32> to vector<8x32xbf16>
    %cst_16 = arith.constant dense<0.000000e+00> : vector<8x32xf32>
    %28 = tpu.matmul %27, %0, %cst_16 {dimension_numbers = #tpu.dot_dimension_numbers<[1], [0], [0], [1], [0, 0, 1, 1], [], []>} : vector<8x32xbf16>, vector<32x32xbf16>, vector<8x32xf32> -> vector<8x32xf32>
    %29 = arith.addf %26, %28 : vector<8x32xf32>
    %30 = math.tanh %29 : vector<8x32xf32>
    %31 = vector.extract_strided_slice %9 {offsets = [32, 0], sizes = [8, 32], strides = [1, 1]} : vector<64x32xf32> to vector<8x32xf32>
    %32 = arith.truncf %30 : vector<8x32xf32> to vector<8x32xbf16>
    %cst_17 = arith.constant dense<0.000000e+00> : vector<8x32xf32>
    %33 = tpu.matmul %32, %0, %cst_17 {dimension_numbers = #tpu.dot_dimension_numbers<[1], [0], [0], [1], [0, 0, 1, 1], [], []>} : vector<8x32xbf16>, vector<32x32xbf16>, vector<8x32xf32> -> vector<8x32xf32>
    %34 = arith.addf %31, %33 : vector<8x32xf32>
    %35 = math.tanh %34 : vector<8x32xf32>
    %36 = vector.extract_strided_slice %9 {offsets = [40, 0], sizes = [8, 32], strides = [1, 1]} : vector<64x32xf32> to vector<8x32xf32>
    %37 = arith.truncf %35 : vector<8x32xf32> to vector<8x32xbf16>
    %cst_18 = arith.constant dense<0.000000e+00> : vector<8x32xf32>
    %38 = tpu.matmul %37, %0, %cst_18 {dimension_numbers = #tpu.dot_dimension_numbers<[1], [0], [0], [1], [0, 0, 1, 1], [], []>} : vector<8x32xbf16>, vector<32x32xbf16>, vector<8x32xf32> -> vector<8x32xf32>
    %39 = arith.addf %36, %38 : vector<8x32xf32>
    %40 = math.tanh %39 : vector<8x32xf32>
    %41 = vector.extract_strided_slice %9 {offsets = [48, 0], sizes = [8, 32], strides = [1, 1]} : vector<64x32xf32> to vector<8x32xf32>
    %42 = arith.truncf %40 : vector<8x32xf32> to vector<8x32xbf16>
    %cst_19 = arith.constant dense<0.000000e+00> : vector<8x32xf32>
    %43 = tpu.matmul %42, %0, %cst_19 {dimension_numbers = #tpu.dot_dimension_numbers<[1], [0], [0], [1], [0, 0, 1, 1], [], []>} : vector<8x32xbf16>, vector<32x32xbf16>, vector<8x32xf32> -> vector<8x32xf32>
    %44 = arith.addf %41, %43 : vector<8x32xf32>
    %45 = math.tanh %44 : vector<8x32xf32>
    %46 = vector.extract_strided_slice %9 {offsets = [56, 0], sizes = [8, 32], strides = [1, 1]} : vector<64x32xf32> to vector<8x32xf32>
    %47 = arith.truncf %45 : vector<8x32xf32> to vector<8x32xbf16>
    %cst_20 = arith.constant dense<0.000000e+00> : vector<8x32xf32>
    %48 = tpu.matmul %47, %0, %cst_20 {dimension_numbers = #tpu.dot_dimension_numbers<[1], [0], [0], [1], [0, 0, 1, 1], [], []>} : vector<8x32xbf16>, vector<32x32xbf16>, vector<8x32xf32> -> vector<8x32xf32>
    %49 = arith.addf %46, %48 : vector<8x32xf32>
    %50 = math.tanh %49 : vector<8x32xf32>
    %51 = tpu.concatenate %15, %20, %25, %30, %35, %40, %45, %50 in 0 : vector<8x32xf32>, vector<8x32xf32>, vector<8x32xf32>, vector<8x32xf32>, vector<8x32xf32>, vector<8x32xf32>, vector<8x32xf32>, vector<8x32xf32> -> vector<64x32xf32>
    %52 = arith.truncf %51 : vector<64x32xf32> to vector<64x32xbf16>
    %c0_21 = arith.constant 0 : index
    %c0_22 = arith.constant 0 : index
    %53 = vector.load %arg4[%c0_21, %c0_22] : memref<32x32xbf16, #tpu.memory_space<vmem>>, vector<32x32xbf16>
    %cst_23 = arith.constant dense<0.000000e+00> : vector<64x32xf32>
    %54 = tpu.matmul %52, %53, %cst_23 {dimension_numbers = #tpu.dot_dimension_numbers<[1], [0], [0], [1], [0, 0, 1, 1], [], []>} : vector<64x32xbf16>, vector<32x32xbf16>, vector<64x32xf32> -> vector<64x32xf32>
    %55 = vector.broadcast %3 : vector<1x32xf32> to vector<64x32xf32>
    %56 = arith.addf %54, %55 : vector<64x32xf32>
    %cst_24 = arith.constant 0.000000e+00 : f32
    %57 = vector.broadcast %cst_24 : f32 to vector<8x32xf32>
    %58 = vector.extract_strided_slice %56 {offsets = [0, 0], sizes = [8, 32], strides = [1, 1]} : vector<64x32xf32> to vector<8x32xf32>
    %59 = arith.truncf %57 : vector<8x32xf32> to vector<8x32xbf16>
    %cst_25 = arith.constant dense<0.000000e+00> : vector<8x32xf32>
    %60 = tpu.matmul %59, %1, %cst_25 {dimension_numbers = #tpu.dot_dimension_numbers<[1], [0], [0], [1], [0, 0, 1, 1], [], []>} : vector<8x32xbf16>, vector<32x32xbf16>, vector<8x32xf32> -> vector<8x32xf32>
    %61 = arith.addf %58, %60 : vector<8x32xf32>
    %62 = math.tanh %61 : vector<8x32xf32>
    %63 = vector.extract_strided_slice %56 {offsets = [8, 0], sizes = [8, 32], strides = [1, 1]} : vector<64x32xf32> to vector<8x32xf32>
    %64 = arith.truncf %62 : vector<8x32xf32> to vector<8x32xbf16>
    %cst_26 = arith.constant dense<0.000000e+00> : vector<8x32xf32>
    %65 = tpu.matmul %64, %1, %cst_26 {dimension_numbers = #tpu.dot_dimension_numbers<[1], [0], [0], [1], [0, 0, 1, 1], [], []>} : vector<8x32xbf16>, vector<32x32xbf16>, vector<8x32xf32> -> vector<8x32xf32>
    %66 = arith.addf %63, %65 : vector<8x32xf32>
    %67 = math.tanh %66 : vector<8x32xf32>
    %68 = vector.extract_strided_slice %56 {offsets = [16, 0], sizes = [8, 32], strides = [1, 1]} : vector<64x32xf32> to vector<8x32xf32>
    %69 = arith.truncf %67 : vector<8x32xf32> to vector<8x32xbf16>
    %cst_27 = arith.constant dense<0.000000e+00> : vector<8x32xf32>
    %70 = tpu.matmul %69, %1, %cst_27 {dimension_numbers = #tpu.dot_dimension_numbers<[1], [0], [0], [1], [0, 0, 1, 1], [], []>} : vector<8x32xbf16>, vector<32x32xbf16>, vector<8x32xf32> -> vector<8x32xf32>
    %71 = arith.addf %68, %70 : vector<8x32xf32>
    %72 = math.tanh %71 : vector<8x32xf32>
    %73 = vector.extract_strided_slice %56 {offsets = [24, 0], sizes = [8, 32], strides = [1, 1]} : vector<64x32xf32> to vector<8x32xf32>
    %74 = arith.truncf %72 : vector<8x32xf32> to vector<8x32xbf16>
    %cst_28 = arith.constant dense<0.000000e+00> : vector<8x32xf32>
    %75 = tpu.matmul %74, %1, %cst_28 {dimension_numbers = #tpu.dot_dimension_numbers<[1], [0], [0], [1], [0, 0, 1, 1], [], []>} : vector<8x32xbf16>, vector<32x32xbf16>, vector<8x32xf32> -> vector<8x32xf32>
    %76 = arith.addf %73, %75 : vector<8x32xf32>
    %77 = math.tanh %76 : vector<8x32xf32>
    %78 = vector.extract_strided_slice %56 {offsets = [32, 0], sizes = [8, 32], strides = [1, 1]} : vector<64x32xf32> to vector<8x32xf32>
    %79 = arith.truncf %77 : vector<8x32xf32> to vector<8x32xbf16>
    %cst_29 = arith.constant dense<0.000000e+00> : vector<8x32xf32>
    %80 = tpu.matmul %79, %1, %cst_29 {dimension_numbers = #tpu.dot_dimension_numbers<[1], [0], [0], [1], [0, 0, 1, 1], [], []>} : vector<8x32xbf16>, vector<32x32xbf16>, vector<8x32xf32> -> vector<8x32xf32>
    %81 = arith.addf %78, %80 : vector<8x32xf32>
    %82 = math.tanh %81 : vector<8x32xf32>
    %83 = vector.extract_strided_slice %56 {offsets = [40, 0], sizes = [8, 32], strides = [1, 1]} : vector<64x32xf32> to vector<8x32xf32>
    %84 = arith.truncf %82 : vector<8x32xf32> to vector<8x32xbf16>
    %cst_30 = arith.constant dense<0.000000e+00> : vector<8x32xf32>
    %85 = tpu.matmul %84, %1, %cst_30 {dimension_numbers = #tpu.dot_dimension_numbers<[1], [0], [0], [1], [0, 0, 1, 1], [], []>} : vector<8x32xbf16>, vector<32x32xbf16>, vector<8x32xf32> -> vector<8x32xf32>
    %86 = arith.addf %83, %85 : vector<8x32xf32>
    %87 = math.tanh %86 : vector<8x32xf32>
    %88 = vector.extract_strided_slice %56 {offsets = [48, 0], sizes = [8, 32], strides = [1, 1]} : vector<64x32xf32> to vector<8x32xf32>
    %89 = arith.truncf %87 : vector<8x32xf32> to vector<8x32xbf16>
    %cst_31 = arith.constant dense<0.000000e+00> : vector<8x32xf32>
    %90 = tpu.matmul %89, %1, %cst_31 {dimension_numbers = #tpu.dot_dimension_numbers<[1], [0], [0], [1], [0, 0, 1, 1], [], []>} : vector<8x32xbf16>, vector<32x32xbf16>, vector<8x32xf32> -> vector<8x32xf32>
    %91 = arith.addf %88, %90 : vector<8x32xf32>
    %92 = math.tanh %91 : vector<8x32xf32>
    %93 = vector.extract_strided_slice %56 {offsets = [56, 0], sizes = [8, 32], strides = [1, 1]} : vector<64x32xf32> to vector<8x32xf32>
    %94 = arith.truncf %92 : vector<8x32xf32> to vector<8x32xbf16>
    %cst_32 = arith.constant dense<0.000000e+00> : vector<8x32xf32>
    %95 = tpu.matmul %94, %1, %cst_32 {dimension_numbers = #tpu.dot_dimension_numbers<[1], [0], [0], [1], [0, 0, 1, 1], [], []>} : vector<8x32xbf16>, vector<32x32xbf16>, vector<8x32xf32> -> vector<8x32xf32>
    %96 = arith.addf %93, %95 : vector<8x32xf32>
    %97 = math.tanh %96 : vector<8x32xf32>
    %98 = arith.truncf %97 : vector<8x32xf32> to vector<8x32xbf16>
    %c0_33 = arith.constant 0 : index
    %c0_34 = arith.constant 0 : index
    %99 = vector.load %arg7[%c0_33, %c0_34] : memref<32x4xbf16, #tpu.memory_space<vmem>>, vector<32x4xbf16>
    %cst_35 = arith.constant dense<0.000000e+00> : vector<8x4xf32>
    %100 = tpu.matmul %98, %99, %cst_35 {dimension_numbers = #tpu.dot_dimension_numbers<[1], [0], [0], [1], [0, 0, 1, 1], [], []>} : vector<8x32xbf16>, vector<32x4xbf16>, vector<8x4xf32> -> vector<8x4xf32>
    %c0_36 = arith.constant 0 : index
    %c0_37 = arith.constant 0 : index
    %101 = vector.load %arg8[%c0_36, %c0_37] : memref<1x4xf32, #tpu.memory_space<vmem>>, vector<1x4xf32>
    %102 = vector.broadcast %101 : vector<1x4xf32> to vector<8x4xf32>
    %103 = arith.addf %100, %102 : vector<8x4xf32>
    %c0_38 = arith.constant 0 : index
    %c0_39 = arith.constant 0 : index
    %104 = vector.load %arg9[%c0_38, %c0_39] : memref<8x4xf32, #tpu.memory_space<vmem>>, vector<8x4xf32>
    tpu.vector_store %arg9[%c0_38, %c0_39], %103 {strides = array<i32>} : memref<8x4xf32, #tpu.memory_space<vmem>>, vector<8x4xf32>,
    return
  }
}

</mosaic_0001>

<llo_original>
// kernel: tpu_custom_call.1
$region0: #{tpu_custom_call.1}
  #allocation0 [shape = 'u32[]', space=smem, size = 0x4, offset = 0x4, fixed_abs, tag = 'smem constant byte address 0x4 - core index']
  #allocation1 [shape = 'u32[144,128]{1,0:T(1,128)}', space=vmem, size = 0x12000, scoped, tag = 'internal scratch']
  %s0 = inlined_call_operand.hbm [shape: bf16[8,8,16], index: 0, kind: input, shape index: {}]
  %s1 = inlined_call_operand.hbm [shape: bf16[16,32], index: 1, kind: input, shape index: {}]
  %s2 = inlined_call_operand.vmem [shape: bf16[32,32], index: 2, kind: input, shape index: {}]
  %s3 = inlined_call_operand.vmem [shape: f32[1,32], index: 3, kind: input, shape index: {}]
  %s4 = inlined_call_operand.hbm [shape: bf16[32,32], index: 4, kind: input, shape index: {}]
  %s5 = inlined_call_operand.hbm [shape: bf16[32,32], index: 5, kind: input, shape index: {}]
  %s6 = inlined_call_operand.vmem [shape: f32[1,32], index: 6, kind: input, shape index: {}]
  %s7 = inlined_call_operand.vmem [shape: bf16[32,4], index: 7, kind: input, shape index: {}]
  %s8 = inlined_call_operand.vmem [shape: f32[1,4], index: 8, kind: input, shape index: {}]
  %s9 = inlined_call_operand.vmem [shape: f32[8,4], index: 9, kind: output, shape index: {}]
  %s10 = sld [smem:[#allocation0]]
  $region62: #{tpu_custom_call.1} parent=0
    _
  %s12 = ssub.s32 1, %s10
  %s13 = scalar_select 0, %s12, %s10
  $region1: #{tpu_custom_call.1} parent=0
    #allocation2 [shape = 'u8[16384]{0}', space=vmem, size = 0x4000, scoped, tag = 'input window, operand 0, single buffered']
    #allocation3 [shape = 's32[1]{0}', space=sflag, size = 0x4, scoped, tag = 'scoped memory for tpu_custom_call.1']
    #allocation4 [shape = 'u8[4096]{0}', space=vmem, size = 0x1000, scoped, tag = 'input window, operand 1, single buffered']
    #allocation5 [shape = 's32[1]{0}', space=sflag, size = 0x4, scoped, tag = 'scoped memory for tpu_custom_call.1']
    #allocation6 [shape = 'u8[8192]{0}', space=vmem, size = 0x2000, scoped, tag = 'input window, operand 4, single buffered']
    #allocation7 [shape = 'u8[8192]{0}', space=vmem, size = 0x2000, scoped, tag = 'input window, operand 5, single buffered']
    #allocation8 [shape = 's32[1]{0}', space=sflag, size = 0x4, scoped, tag = 'scoped memory for tpu_custom_call.1']
    %14 = vsyncpa [#allocation3], 0
    %15 = vsyncpa [#allocation5], 0
    %16 = vsyncpa [#allocation8], 0
    // Predicated region
    $region2: #{tpu_custom_call.1} parent=1 // pred_check
      _
    $region3: #{tpu_custom_call.1} parent=1 // pred_check_branch
      %18 = sbr.rel (0) target = $region5
    $region4: #{tpu_custom_call.1} parent=1 // pred_region
      %s20 = ssub.s32 512, 512
      %21 = vsyncadd [#allocation3], %s20
      %s22 = sshll.u32 [#allocation2], 4
      %s23 = int_to_ptr.vmem [resolvable:$true] %s22
      %28 = dma.hbm_to_vmem [thread:$0]  %s0, 512, %s23, [#allocation3], 64, 64, 4
    $region5: #{tpu_custom_call.1} parent=1 // pred_fallthru
      _
    // Predicated region
    $region6: #{tpu_custom_call.1} parent=1 // pred_check
      _
    $region7: #{tpu_custom_call.1} parent=1 // pred_check_branch
      %30 = sbr.rel (0) target = $region9
    $region8: #{tpu_custom_call.1} parent=1 // pred_region
      %s32 = ssub.s32 128, 128
      %33 = vsyncadd [#allocation5], %s32
      %s34 = sshll.u32 [#allocation4], 4
      %s35 = int_to_ptr.vmem [resolvable:$true] %s34
      %40 = dma.hbm_to_vmem [thread:$0]  %s1, 128, %s35, [#allocation5], 64, 64, 4
    $region9: #{tpu_custom_call.1} parent=1 // pred_fallthru
      _
    // Predicated region
    $region10: #{tpu_custom_call.1} parent=1 // pred_check
      _
    $region11: #{tpu_custom_call.1} parent=1 // pred_check_branch
      %42 = sbr.rel (0) target = $region13
    $region12: #{tpu_custom_call.1} parent=1 // pred_region
      _
    $region13: #{tpu_custom_call.1} parent=1 // pred_fallthru
      _
    // Predicated region
    $region14: #{tpu_custom_call.1} parent=1 // pred_check
      _
    $region15: #{tpu_custom_call.1} parent=1 // pred_check_branch
      %44 = sbr.rel (0) target = $region17
    $region16: #{tpu_custom_call.1} parent=1 // pred_region
      _
    $region17: #{tpu_custom_call.1} parent=1 // pred_fallthru
      _
    // Predicated region
    $region18: #{tpu_custom_call.1} parent=1 // pred_check
      _
    $region19: #{tpu_custom_call.1} parent=1 // pred_check_branch
      %46 = sbr.rel (0) target = $region21
    $region20: #{tpu_custom_call.1} parent=1 // pred_region
      %s48 = ssub.s32 256, 256
      %49 = vsyncadd [#allocation5], %s48
      %s50 = sshll.u32 [#allocation6], 4
      %s51 = int_to_ptr.vmem [resolvable:$true] %s50
      %56 = dma.hbm_to_vmem [thread:$0]  %s4, 256, %s51, [#allocation5], 64, 64, 4
    $region21: #{tpu_custom_call.1} parent=1 // pred_fallthru
      _
    // Predicated region
    $region22: #{tpu_custom_call.1} parent=1 // pred_check
      _
    $region23: #{tpu_custom_call.1} parent=1 // pred_check_branch
      %58 = sbr.rel (0) target = $region25
    $region24: #{tpu_custom_call.1} parent=1 // pred_region
      %s60 = ssub.s32 256, 256
      %61 = vsyncadd [#allocation8], %s60
      %s62 = sshll.u32 [#allocation7], 4
      %s63 = int_to_ptr.vmem [resolvable:$true] %s62
      %68 = dma.hbm_to_vmem [thread:$0]  %s5, 256, %s63, [#allocation8], 64, 64, 4
    $region25: #{tpu_custom_call.1} parent=1 // pred_fallthru
      _
    // Predicated region
    $region26: #{tpu_custom_call.1} parent=1 // pred_check
      _
    $region27: #{tpu_custom_call.1} parent=1 // pred_check_branch
      %70 = sbr.rel (0) target = $region29
    $region28: #{tpu_custom_call.1} parent=1 // pred_region
      _
    $region29: #{tpu_custom_call.1} parent=1 // pred_fallthru
      _
    // Predicated region
    $region30: #{tpu_custom_call.1} parent=1 // pred_check
      _
    $region31: #{tpu_custom_call.1} parent=1 // pred_check_branch
      %72 = sbr.rel (0) target = $region33
    $region32: #{tpu_custom_call.1} parent=1 // pred_region
      _
    $region33: #{tpu_custom_call.1} parent=1 // pred_fallthru
      _
    // Predicated region
    $region34: #{tpu_custom_call.1} parent=1 // pred_check
      _
    $region35: #{tpu_custom_call.1} parent=1 // pred_check_branch
      %74 = sbr.rel (0) target = $region37
    $region36: #{tpu_custom_call.1} parent=1 // pred_region
      _
    $region37: #{tpu_custom_call.1} parent=1 // pred_fallthru
      _
    // Predicated region
    $region38: #{tpu_custom_call.1} parent=1 // pred_check
      _
    $region39: #{tpu_custom_call.1} parent=1 // pred_check_branch
      %76 = sbr.rel (0) target = $region41
    $region40: #{tpu_custom_call.1} parent=1 // pred_region
      %77 = dma.done [#allocation3], 512
    $region41: #{tpu_custom_call.1} parent=1 // pred_fallthru
      _
    // Predicated region
    $region42: #{tpu_custom_call.1} parent=1 // pred_check
      _
    $region43: #{tpu_custom_call.1} parent=1 // pred_check_branch
      %79 = sbr.rel (0) target = $region45
    $region44: #{tpu_custom_call.1} parent=1 // pred_region
      %80 = dma.done [#allocation5], 128
    $region45: #{tpu_custom_call.1} parent=1 // pred_fallthru
      _
    // Predicated region
    $region46: #{tpu_custom_call.1} parent=1 // pred_check
      _
    $region47: #{tpu_custom_call.1} parent=1 // pred_check_branch
      %82 = sbr.rel (0) target = $region49
    $region48: #{tpu_custom_call.1} parent=1 // pred_region
      %83 = dma.done [#allocation5], 256
    $region49: #{tpu_custom_call.1} parent=1 // pred_fallthru
      _
    // Predicated region
    $region50: #{tpu_custom_call.1} parent=1 // pred_check
      _
    $region51: #{tpu_custom_call.1} parent=1 // pred_check_branch
      %85 = sbr.rel (0) target = $region53
    $region52: #{tpu_custom_call.1} parent=1 // pred_region
      %86 = dma.done [#allocation8], 256
    $region53: #{tpu_custom_call.1} parent=1 // pred_fallthru
      _
    %v88 = vld [vmem:[%s2] sm:$0xf]
    %v89 = vld [vmem:[%s2 + $0x4] sm:$0xf]
    %v90 = vld [vmem:[%s2 + $0x8] sm:$0xf]
    %v91 = vld [vmem:[%s2 + $0xc] sm:$0xf]
    %v92 = vld [vmem:[#allocation7] sm:$0xf]
    %v93 = vld [vmem:[#allocation7 + $0x4] sm:$0xf]
    %v94 = vld [vmem:[#allocation7 + $0x8] sm:$0xf]
    %v95 = vld [vmem:[#allocation7 + $0xc] sm:$0xf]
    %v96 = vld [vmem:[%s3] sm:$0x1]
    %v97 = vld [vmem:[%s6] sm:$0x1]
    %v98 = vld [vmem:[#allocation2] sm:$0xf]
    %v99 = vld [vmem:[#allocation2 + $0x4] sm:$0xf]
    %v100 = vld [vmem:[#allocation2 + $0x8] sm:$0xf]
    %v101 = vld [vmem:[#allocation2 + $0xc] sm:$0xf]
    %v102 = vld [vmem:[#allocation2 + $0x10] sm:$0xf]
    %v103 = vld [vmem:[#allocation2 + $0x14] sm:$0xf]
    %v104 = vld [vmem:[#allocation2 + $0x18] sm:$0xf]
    %v105 = vld [vmem:[#allocation2 + $0x1c] sm:$0xf]
    %v106 = vld [vmem:[#allocation4] sm:$0xf]
    %v107 = vld [vmem:[#allocation4 + $0x4] sm:$0xf]
    %v109 = vlaneseq
    %v110 = vshrl.u32 %v109, 7
    %v111 = vsub.s32 0, %v110
    %v112 = vrot.slane %v96, %v111
    %v122 = vunpack.c.l.b16 %v98
    %v123 = vunpack.c.l.b16 %v99
    %v124 = vunpack.c.l.b16 %v100
    %v125 = vunpack.c.l.b16 %v101
    %v126 = vunpack.c.l.b16 %v102
    %v127 = vunpack.c.l.b16 %v103
    %v128 = vunpack.c.l.b16 %v104
    %v129 = vunpack.c.l.b16 %v105
    %v130 = vpack.c.b16 %v123, %v122
    %v131 = vpack.c.b16 %v125, %v124
    %v132 = vpack.c.b16 %v127, %v126
    %v133 = vpack.c.b16 %v129, %v128
    %v136 = vunpack.c.l.b16 %v106
    %v137 = vunpack.c.l.b16 %v107
    %v138 = vpack.c.b16 %v137, %v136
    %vm140 = vcmask 130048
    %v142 = vsel %vm140, %v130, 0
    %v145 = vsel %vm140, %v131, 0
    %v148 = vsel %vm140, %v132, 0
    %v151 = vsel %vm140, %v133, 0
    %153 = vmatprep.subr.bf16.mxu0 0
    %154 = vmatpush1.bf16.msra.mxu0 0
    %155 = vmatprep.subr.bf16.mxu0 0
    %156 = vmatpush1.bf16.msra.mxu0 0
    %157 = vmatprep.subr.bf16.mxu0 0
    %158 = vmatpush1.bf16.msra.mxu0 0
    %159 = vmatprep.subr.bf16.mxu0 0
    %160 = vmatpush1.bf16.msra.mxu0 0
    %161 = vmatprep.subr.bf16.mxu0 0
    %162 = vmatpush1.bf16.msra.mxu0 0
    %163 = vmatprep.subr.bf16.mxu0 0
    %164 = vmatpush1.bf16.msra.mxu0 0
    %165 = vmatprep.subr.bf16.mxu0 0
    %166 = vmatpush1.bf16.msra.mxu0 0
    %167 = vmatprep.subr.bf16.mxu0 0
    %168 = vmatpush1.bf16.msra.mxu0 %v138
    %169 = vmatprep.subr.bf16.mxu0 0
    %170 = vmatpush2.bf16.msra.mxu0 0
    %171 = vmatprep.subr.bf16.mxu0 0
    %172 = vmatpush2.bf16.msra.mxu0 0
    %173 = vmatprep.subr.bf16.mxu0 0
    %174 = vmatpush2.bf16.msra.mxu0 0
    %175 = vmatprep.subr.bf16.mxu0 0
    %176 = vmatpush2.bf16.msra.mxu0 0
    %177 = vmatprep.subr.bf16.mxu0 0
    %178 = vmatpush2.bf16.msra.mxu0 0
    %179 = vmatprep.subr.bf16.mxu0 0
    %180 = vmatpush2.bf16.msra.mxu0 0
    %181 = vmatprep.subr.bf16.mxu0 0
    %182 = vmatpush2.bf16.msra.mxu0 0
    %183 = vmatprep.subr.bf16.mxu0 0
    %184 = vmatpush2.bf16.msra.mxu0 0
    %185 = vmatprep.mubr.bf16.mxu0 0
    %186 = vmatmul.mubr.bf16.gmra.mxu0 %v142
    %v187 = vpop.f32.mrf.mxu0
    %v188 = vadd.f32 %v112, %v187
    %v189 = vpop.f32.mrf.mxu0
    %v190 = vpop.f32.mrf.mxu0
    %v191 = vadd.f32 %v112, %v190
    %v192 = vpop.f32.mrf.mxu0
    %193 = vmatprep.mubr.bf16.mxu0 0
    %194 = vmatmul.mubr.bf16.gmra.mxu0 %v145
    %v195 = vpop.f32.mrf.mxu0
    %v196 = vadd.f32 %v112, %v195
    %v197 = vpop.f32.mrf.mxu0
    %v198 = vpop.f32.mrf.mxu0
    %v199 = vadd.f32 %v112, %v198
    %v200 = vpop.f32.mrf.mxu0
    %201 = vmatprep.mubr.bf16.mxu0 0
    %202 = vmatmul.mubr.bf16.gmra.mxu0 %v148
    %v203 = vpop.f32.mrf.mxu0
    %v204 = vadd.f32 %v112, %v203
    %v205 = vpop.f32.mrf.mxu0
    %v206 = vpop.f32.mrf.mxu0
    %v207 = vadd.f32 %v112, %v206
    %v208 = vpop.f32.mrf.mxu0
    %209 = vmatprep.mubr.bf16.mxu0 0
    %210 = vmatmul.mubr.bf16.gmra.mxu0 %v151
    %v211 = vpop.f32.mrf.mxu0
    %v212 = vadd.f32 %v112, %v211
    %v213 = vpop.f32.mrf.mxu0
    %v214 = vpop.f32.mrf.mxu0
    %v215 = vadd.f32 %v112, %v214
    %v216 = vpop.f32.mrf.mxu0
    %217 = vdwg.mxu0
    %v222 = vunpack.c.l.b16 %v88
    %v223 = vunpack.c.l.b16 %v89
    %v224 = vunpack.c.l.b16 %v90
    %v225 = vunpack.c.l.b16 %v91
    %v226 = vpack.c.b16 %v223, %v222
    %v227 = vpack.c.b16 %v225, %v224
    %vm230 = vcmask 261120
    %v232 = vsel %vm230, 0, 0
    %234 = vmatprep.subr.bf16.mxu0 0
    %235 = vmatpush1.bf16.msra.mxu0 0
    %236 = vmatprep.subr.bf16.mxu0 0
    %237 = vmatpush1.bf16.msra.mxu0 0
    %238 = vmatprep.subr.bf16.mxu0 0
    %239 = vmatpush1.bf16.msra.mxu0 0
    %240 = vmatprep.subr.bf16.mxu0 0
    %241 = vmatpush1.bf16.msra.mxu0 0
    %242 = vmatprep.subr.bf16.mxu0 0
    %243 = vmatpush1.bf16.msra.mxu0 0
    %244 = vmatprep.subr.bf16.mxu0 0
    %245 = vmatpush1.bf16.msra.mxu0 0
    %246 = vmatprep.subr.bf16.mxu0 0
    %247 = vmatpush1.bf16.msra.mxu0 %v227
    %248 = vmatprep.subr.bf16.mxu0 0
    %249 = vmatpush1.bf16.msra.mxu0 %v226
    %250 = vmatprep.subr.bf16.mxu0 0
    %251 = vmatpush2.bf16.msra.mxu0 0
    %252 = vmatprep.subr.bf16.mxu0 0
    %253 = vmatpush2.bf16.msra.mxu0 0
    %254 = vmatprep.subr.bf16.mxu0 0
    %255 = vmatpush2.bf16.msra.mxu0 0
    %256 = vmatprep.subr.bf16.mxu0 0
    %257 = vmatpush2.bf16.msra.mxu0 0
    %258 = vmatprep.subr.bf16.mxu0 0
    %259 = vmatpush2.bf16.msra.mxu0 0
    %260 = vmatprep.subr.bf16.mxu0 0
    %261 = vmatpush2.bf16.msra.mxu0 0
    %262 = vmatprep.subr.bf16.mxu0 0
    %263 = vmatpush2.bf16.msra.mxu0 0
    %264 = vmatprep.subr.bf16.mxu0 0
    %265 = vmatpush2.bf16.msra.mxu0 0
    %266 = vmatprep.mubr.bf16.mxu0 0
    %267 = vmatmul.mubr.bf16.gmra.mxu0 %v232
    %v268 = vpop.f32.mrf.mxu0
    %v269 = vadd.f32 0.0, %v268
    %v270 = vpop.f32.mrf.mxu0
    %v271 = vpop.f32.mrf.mxu0
    %v272 = vpop.f32.mrf.mxu0
    %273 = vdwg.mxu0
    %v274 = vadd.f32 %v188, %v269
    %v275 = vtanh.pop %v274
    %v276 = vpack.c.bf16 %v275, %v275
    %v278 = vsel %vm230, %v276, 0
    %280 = vmatprep.subr.bf16.mxu0 0
    %281 = vmatpush1.bf16.msra.mxu0 0
    %282 = vmatprep.subr.bf16.mxu0 0
    %283 = vmatpush1.bf16.msra.mxu0 0
    %284 = vmatprep.subr.bf16.mxu0 0
    %285 = vmatpush1.bf16.msra.mxu0 0
    %286 = vmatprep.subr.bf16.mxu0 0
    %287 = vmatpush1.bf16.msra.mxu0 0
    %288 = vmatprep.subr.bf16.mxu0 0
    %289 = vmatpush1.bf16.msra.mxu0 0
    %290 = vmatprep.subr.bf16.mxu0 0
    %291 = vmatpush1.bf16.msra.mxu0 0
    %292 = vmatprep.subr.bf16.mxu0 0
    %293 = vmatpush1.bf16.msra.mxu0 %v227
    %294 = vmatprep.subr.bf16.mxu0 0
    %295 = vmatpush1.bf16.msra.mxu0 %v226
    %296 = vmatprep.subr.bf16.mxu0 0
    %297 = vmatpush2.bf16.msra.mxu0 0
    %298 = vmatprep.subr.bf16.mxu0 0
    %299 = vmatpush2.bf16.msra.mxu0 0
    %300 = vmatprep.subr.bf16.mxu0 0
    %301 = vmatpush2.bf16.msra.mxu0 0
    %302 = vmatprep.subr.bf16.mxu0 0
    %303 = vmatpush2.bf16.msra.mxu0 0
    %304 = vmatprep.subr.bf16.mxu0 0
    %305 = vmatpush2.bf16.msra.mxu0 0
    %306 = vmatprep.subr.bf16.mxu0 0
    %307 = vmatpush2.bf16.msra.mxu0 0
    %308 = vmatprep.subr.bf16.mxu0 0
    %309 = vmatpush2.bf16.msra.mxu0 0
    %310 = vmatprep.subr.bf16.mxu0 0
    %311 = vmatpush2.bf16.msra.mxu0 0
    %312 = vmatprep.mubr.bf16.mxu0 0
    %313 = vmatmul.mubr.bf16.gmra.mxu0 %v278
    %v314 = vpop.f32.mrf.mxu0
    %v315 = vadd.f32 0.0, %v314
    %v316 = vpop.f32.mrf.mxu0
    %v317 = vpop.f32.mrf.mxu0
    %v318 = vpop.f32.mrf.mxu0
    %319 = vdwg.mxu0
    %v320 = vadd.f32 %v191, %v315
    %v321 = vtanh.pop %v320
    %v322 = vpack.c.bf16 %v321, %v321
    %v324 = vsel %vm230, %v322, 0
    %326 = vmatprep.subr.bf16.mxu0 0
    %327 = vmatpush1.bf16.msra.mxu0 0
    %328 = vmatprep.subr.bf16.mxu0 0
    %329 = vmatpush1.bf16.msra.mxu0 0
    %330 = vmatprep.subr.bf16.mxu0 0
    %331 = vmatpush1.bf16.msra.mxu0 0
    %332 = vmatprep.subr.bf16.mxu0 0
    %333 = vmatpush1.bf16.msra.mxu0 0
    %334 = vmatprep.subr.bf16.mxu0 0
    %335 = vmatpush1.bf16.msra.mxu0 0
    %336 = vmatprep.subr.bf16.mxu0 0
    %337 = vmatpush1.bf16.msra.mxu0 0
    %338 = vmatprep.subr.bf16.mxu0 0
    %339 = vmatpush1.bf16.msra.mxu0 %v227
    %340 = vmatprep.subr.bf16.mxu0 0
    %341 = vmatpush1.bf16.msra.mxu0 %v226
    %342 = vmatprep.subr.bf16.mxu0 0
    %343 = vmatpush2.bf16.msra.mxu0 0
    %344 = vmatprep.subr.bf16.mxu0 0
    %345 = vmatpush2.bf16.msra.mxu0 0
    %346 = vmatprep.subr.bf16.mxu0 0
    %347 = vmatpush2.bf16.msra.mxu0 0
    %348 = vmatprep.subr.bf16.mxu0 0
    %349 = vmatpush2.bf16.msra.mxu0 0
    %350 = vmatprep.subr.bf16.mxu0 0
    %351 = vmatpush2.bf16.msra.mxu0 0
    %352 = vmatprep.subr.bf16.mxu0 0
    %353 = vmatpush2.bf16.msra.mxu0 0
    %354 = vmatprep.subr.bf16.mxu0 0
    %355 = vmatpush2.bf16.msra.mxu0 0
    %356 = vmatprep.subr.bf16.mxu0 0
    %357 = vmatpush2.bf16.msra.mxu0 0
    %358 = vmatprep.mubr.bf16.mxu0 0
    %359 = vmatmul.mubr.bf16.gmra.mxu0 %v324
    %v360 = vpop.f32.mrf.mxu0
    %v361 = vadd.f32 0.0, %v360
    %v362 = vpop.f32.mrf.mxu0
    %v363 = vpop.f32.mrf.mxu0
    %v364 = vpop.f32.mrf.mxu0
    %365 = vdwg.mxu0
    %v366 = vadd.f32 %v196, %v361
    %v367 = vtanh.pop %v366
    %v368 = vpack.c.bf16 %v367, %v367
    %v370 = vsel %vm230, %v368, 0
    %372 = vmatprep.subr.bf16.mxu0 0
    %373 = vmatpush1.bf16.msra.mxu0 0
    %374 = vmatprep.subr.bf16.mxu0 0
    %375 = vmatpush1.bf16.msra.mxu0 0
    %376 = vmatprep.subr.bf16.mxu0 0
    %377 = vmatpush1.bf16.msra.mxu0 0
    %378 = vmatprep.subr.bf16.mxu0 0
    %379 = vmatpush1.bf16.msra.mxu0 0
    %380 = vmatprep.subr.bf16.mxu0 0
    %381 = vmatpush1.bf16.msra.mxu0 0
    %382 = vmatprep.subr.bf16.mxu0 0
    %383 = vmatpush1.bf16.msra.mxu0 0
    %384 = vmatprep.subr.bf16.mxu0 0
    %385 = vmatpush1.bf16.msra.mxu0 %v227
    %386 = vmatprep.subr.bf16.mxu0 0
    %387 = vmatpush1.bf16.msra.mxu0 %v226
    %388 = vmatprep.subr.bf16.mxu0 0
    %389 = vmatpush2.bf16.msra.mxu0 0
    %390 = vmatprep.subr.bf16.mxu0 0
    %391 = vmatpush2.bf16.msra.mxu0 0
    %392 = vmatprep.subr.bf16.mxu0 0
    %393 = vmatpush2.bf16.msra.mxu0 0
    %394 = vmatprep.subr.bf16.mxu0 0
    %395 = vmatpush2.bf16.msra.mxu0 0
    %396 = vmatprep.subr.bf16.mxu0 0
    %397 = vmatpush2.bf16.msra.mxu0 0
    %398 = vmatprep.subr.bf16.mxu0 0
    %399 = vmatpush2.bf16.msra.mxu0 0
    %400 = vmatprep.subr.bf16.mxu0 0
    %401 = vmatpush2.bf16.msra.mxu0 0
    %402 = vmatprep.subr.bf16.mxu0 0
    %403 = vmatpush2.bf16.msra.mxu0 0
    %404 = vmatprep.mubr.bf16.mxu0 0
    %405 = vmatmul.mubr.bf16.gmra.mxu0 %v370
    %v406 = vpop.f32.mrf.mxu0
    %v407 = vadd.f32 0.0, %v406
    %v408 = vpop.f32.mrf.mxu0
    %v409 = vpop.f32.mrf.mxu0
    %v410 = vpop.f32.mrf.mxu0
    %411 = vdwg.mxu0
    %v412 = vadd.f32 %v199, %v407
    %v413 = vtanh.pop %v412
    %v414 = vpack.c.bf16 %v413, %v413
    %v416 = vsel %vm230, %v414, 0
    %418 = vmatprep.subr.bf16.mxu0 0
    %419 = vmatpush1.bf16.msra.mxu0 0
    %420 = vmatprep.subr.bf16.mxu0 0
    %421 = vmatpush1.bf16.msra.mxu0 0
    %422 = vmatprep.subr.bf16.mxu0 0
    %423 = vmatpush1.bf16.msra.mxu0 0
    %424 = vmatprep.subr.bf16.mxu0 0
    %425 = vmatpush1.bf16.msra.mxu0 0
    %426 = vmatprep.subr.bf16.mxu0 0
    %427 = vmatpush1.bf16.msra.mxu0 0
    %428 = vmatprep.subr.bf16.mxu0 0
    %429 = vmatpush1.bf16.msra.mxu0 0
    %430 = vmatprep.subr.bf16.mxu0 0
    %431 = vmatpush1.bf16.msra.mxu0 %v227
    %432 = vmatprep.subr.bf16.mxu0 0
    %433 = vmatpush1.bf16.msra.mxu0 %v226
    %434 = vmatprep.subr.bf16.mxu0 0
    %435 = vmatpush2.bf16.msra.mxu0 0
    %436 = vmatprep.subr.bf16.mxu0 0
    %437 = vmatpush2.bf16.msra.mxu0 0
    %438 = vmatprep.subr.bf16.mxu0 0
    %439 = vmatpush2.bf16.msra.mxu0 0
    %440 = vmatprep.subr.bf16.mxu0 0
    %441 = vmatpush2.bf16.msra.mxu0 0
    %442 = vmatprep.subr.bf16.mxu0 0
    %443 = vmatpush2.bf16.msra.mxu0 0
    %444 = vmatprep.subr.bf16.mxu0 0
    %445 = vmatpush2.bf16.msra.mxu0 0
    %446 = vmatprep.subr.bf16.mxu0 0
    %447 = vmatpush2.bf16.msra.mxu0 0
    %448 = vmatprep.subr.bf16.mxu0 0
    %449 = vmatpush2.bf16.msra.mxu0 0
    %450 = vmatprep.mubr.bf16.mxu0 0
    %451 = vmatmul.mubr.bf16.gmra.mxu0 %v416
    %v452 = vpop.f32.mrf.mxu0
    %v453 = vadd.f32 0.0, %v452
    %v454 = vpop.f32.mrf.mxu0
    %v455 = vpop.f32.mrf.mxu0
    %v456 = vpop.f32.mrf.mxu0
    %457 = vdwg.mxu0
    %v458 = vadd.f32 %v204, %v453
    %v459 = vtanh.pop %v458
    %v460 = vpack.c.bf16 %v459, %v459
    %v462 = vsel %vm230, %v460, 0
    %464 = vmatprep.subr.bf16.mxu0 0
    %465 = vmatpush1.bf16.msra.mxu0 0
    %466 = vmatprep.subr.bf16.mxu0 0
    %467 = vmatpush1.bf16.msra.mxu0 0
    %468 = vmatprep.subr.bf16.mxu0 0
    %469 = vmatpush1.bf16.msra.mxu0 0
    %470 = vmatprep.subr.bf16.mxu0 0
    %471 = vmatpush1.bf16.msra.mxu0 0
    %472 = vmatprep.subr.bf16.mxu0 0
    %473 = vmatpush1.bf16.msra.mxu0 0
    %474 = vmatprep.subr.bf16.mxu0 0
    %475 = vmatpush1.bf16.msra.mxu0 0
    %476 = vmatprep.subr.bf16.mxu0 0
    %477 = vmatpush1.bf16.msra.mxu0 %v227
    %478 = vmatprep.subr.bf16.mxu0 0
    %479 = vmatpush1.bf16.msra.mxu0 %v226
    %480 = vmatprep.subr.bf16.mxu0 0
    %481 = vmatpush2.bf16.msra.mxu0 0
    %482 = vmatprep.subr.bf16.mxu0 0
    %483 = vmatpush2.bf16.msra.mxu0 0
    %484 = vmatprep.subr.bf16.mxu0 0
    %485 = vmatpush2.bf16.msra.mxu0 0
    %486 = vmatprep.subr.bf16.mxu0 0
    %487 = vmatpush2.bf16.msra.mxu0 0
    %488 = vmatprep.subr.bf16.mxu0 0
    %489 = vmatpush2.bf16.msra.mxu0 0
    %490 = vmatprep.subr.bf16.mxu0 0
    %491 = vmatpush2.bf16.msra.mxu0 0
    %492 = vmatprep.subr.bf16.mxu0 0
    %493 = vmatpush2.bf16.msra.mxu0 0
    %494 = vmatprep.subr.bf16.mxu0 0
    %495 = vmatpush2.bf16.msra.mxu0 0
    %496 = vmatprep.mubr.bf16.mxu0 0
    %497 = vmatmul.mubr.bf16.gmra.mxu0 %v462
    %v498 = vpop.f32.mrf.mxu0
    %v499 = vadd.f32 0.0, %v498
    %v500 = vpop.f32.mrf.mxu0
    %v501 = vpop.f32.mrf.mxu0
    %v502 = vpop.f32.mrf.mxu0
    %503 = vdwg.mxu0
    %v504 = vadd.f32 %v207, %v499
    %v505 = vtanh.pop %v504
    %v506 = vpack.c.bf16 %v505, %v505
    %v508 = vsel %vm230, %v506, 0
    %510 = vmatprep.subr.bf16.mxu0 0
    %511 = vmatpush1.bf16.msra.mxu0 0
    %512 = vmatprep.subr.bf16.mxu0 0
    %513 = vmatpush1.bf16.msra.mxu0 0
    %514 = vmatprep.subr.bf16.mxu0 0
    %515 = vmatpush1.bf16.msra.mxu0 0
    %516 = vmatprep.subr.bf16.mxu0 0
    %517 = vmatpush1.bf16.msra.mxu0 0
    %518 = vmatprep.subr.bf16.mxu0 0
    %519 = vmatpush1.bf16.msra.mxu0 0
    %520 = vmatprep.subr.bf16.mxu0 0
    %521 = vmatpush1.bf16.msra.mxu0 0
    %522 = vmatprep.subr.bf16.mxu0 0
    %523 = vmatpush1.bf16.msra.mxu0 %v227
    %524 = vmatprep.subr.bf16.mxu0 0
    %525 = vmatpush1.bf16.msra.mxu0 %v226
    %526 = vmatprep.subr.bf16.mxu0 0
    %527 = vmatpush2.bf16.msra.mxu0 0
    %528 = vmatprep.subr.bf16.mxu0 0
    %529 = vmatpush2.bf16.msra.mxu0 0
    %530 = vmatprep.subr.bf16.mxu0 0
    %531 = vmatpush2.bf16.msra.mxu0 0
    %532 = vmatprep.subr.bf16.mxu0 0
    %533 = vmatpush2.bf16.msra.mxu0 0
    %534 = vmatprep.subr.bf16.mxu0 0
    %535 = vmatpush2.bf16.msra.mxu0 0
    %536 = vmatprep.subr.bf16.mxu0 0
    %537 = vmatpush2.bf16.msra.mxu0 0
    %538 = vmatprep.subr.bf16.mxu0 0
    %539 = vmatpush2.bf16.msra.mxu0 0
    %540 = vmatprep.subr.bf16.mxu0 0
    %541 = vmatpush2.bf16.msra.mxu0 0
    %542 = vmatprep.mubr.bf16.mxu0 0
    %543 = vmatmul.mubr.bf16.gmra.mxu0 %v508
    %v544 = vpop.f32.mrf.mxu0
    %v545 = vadd.f32 0.0, %v544
    %v546 = vpop.f32.mrf.mxu0
    %v547 = vpop.f32.mrf.mxu0
    %v548 = vpop.f32.mrf.mxu0
    %549 = vdwg.mxu0
    %v550 = vadd.f32 %v212, %v545
    %v551 = vtanh.pop %v550
    %v552 = vpack.c.bf16 %v551, %v551
    %v554 = vsel %vm230, %v552, 0
    %556 = vmatprep.subr.bf16.mxu0 0
    %557 = vmatpush1.bf16.msra.mxu0 0
    %558 = vmatprep.subr.bf16.mxu0 0
    %559 = vmatpush1.bf16.msra.mxu0 0
    %560 = vmatprep.subr.bf16.mxu0 0
    %561 = vmatpush1.bf16.msra.mxu0 0
    %562 = vmatprep.subr.bf16.mxu0 0
    %563 = vmatpush1.bf16.msra.mxu0 0
    %564 = vmatprep.subr.bf16.mxu0 0
    %565 = vmatpush1.bf16.msra.mxu0 0
    %566 = vmatprep.subr.bf16.mxu0 0
    %567 = vmatpush1.bf16.msra.mxu0 0
    %568 = vmatprep.subr.bf16.mxu0 0
    %569 = vmatpush1.bf16.msra.mxu0 %v227
    %570 = vmatprep.subr.bf16.mxu0 0
    %571 = vmatpush1.bf16.msra.mxu0 %v226
    %572 = vmatprep.subr.bf16.mxu0 0
    %573 = vmatpush2.bf16.msra.mxu0 0
    %574 = vmatprep.subr.bf16.mxu0 0
    %575 = vmatpush2.bf16.msra.mxu0 0
    %576 = vmatprep.subr.bf16.mxu0 0
    %577 = vmatpush2.bf16.msra.mxu0 0
    %578 = vmatprep.subr.bf16.mxu0 0
    %579 = vmatpush2.bf16.msra.mxu0 0
    %580 = vmatprep.subr.bf16.mxu0 0
    %581 = vmatpush2.bf16.msra.mxu0 0
    %582 = vmatprep.subr.bf16.mxu0 0
    %583 = vmatpush2.bf16.msra.mxu0 0
    %584 = vmatprep.subr.bf16.mxu0 0
    %585 = vmatpush2.bf16.msra.mxu0 0
    %586 = vmatprep.subr.bf16.mxu0 0
    %587 = vmatpush2.bf16.msra.mxu0 0
    %588 = vmatprep.mubr.bf16.mxu0 0
    %589 = vmatmul.mubr.bf16.gmra.mxu0 %v554
    %v590 = vpop.f32.mrf.mxu0
    %v591 = vadd.f32 0.0, %v590
    %v592 = vpop.f32.mrf.mxu0
    %v593 = vpop.f32.mrf.mxu0
    %v594 = vpop.f32.mrf.mxu0
    %595 = vdwg.mxu0
    %v596 = vadd.f32 %v215, %v591
    %v597 = vtanh.pop %v596
    %v598 = vpack.c.bf16 %v321, %v275
    %v599 = vpack.c.bf16 %v413, %v367
    %v600 = vpack.c.bf16 %v505, %v459
    %v601 = vpack.c.bf16 %v597, %v551
    %v602 = vld [vmem:[#allocation6] sm:$0xf]
    %v603 = vld [vmem:[#allocation6 + $0x4] sm:$0xf]
    %v604 = vld [vmem:[#allocation6 + $0x8] sm:$0xf]
    %v605 = vld [vmem:[#allocation6 + $0xc] sm:$0xf]
    %v607 = vlaneseq
    %v608 = vshrl.u32 %v607, 7
    %v609 = vsub.s32 0, %v608
    %v610 = vrot.slane %v97, %v609
    %v616 = vunpack.c.l.b16 %v602
    %v617 = vunpack.c.l.b16 %v603
    %v618 = vunpack.c.l.b16 %v604
    %v619 = vunpack.c.l.b16 %v605
    %v620 = vpack.c.b16 %v617, %v616
    %v621 = vpack.c.b16 %v619, %v618
    %v625 = vsel %vm230, %v598, 0
    %v628 = vsel %vm230, %v599, 0
    %v631 = vsel %vm230, %v600, 0
    %v634 = vsel %vm230, %v601, 0
    %636 = vmatprep.subr.bf16.mxu0 0
    %637 = vmatpush1.bf16.msra.mxu0 0
    %638 = vmatprep.subr.bf16.mxu0 0
    %639 = vmatpush1.bf16.msra.mxu0 0
    %640 = vmatprep.subr.bf16.mxu0 0
    %641 = vmatpush1.bf16.msra.mxu0 0
    %642 = vmatprep.subr.bf16.mxu0 0
    %643 = vmatpush1.bf16.msra.mxu0 0
    %644 = vmatprep.subr.bf16.mxu0 0
    %645 = vmatpush1.bf16.msra.mxu0 0
    %646 = vmatprep.subr.bf16.mxu0 0
    %647 = vmatpush1.bf16.msra.mxu0 0
    %648 = vmatprep.subr.bf16.mxu0 0
    %649 = vmatpush1.bf16.msra.mxu0 %v621
    %650 = vmatprep.subr.bf16.mxu0 0
    %651 = vmatpush1.bf16.msra.mxu0 %v620
    %652 = vmatprep.subr.bf16.mxu0 0
    %653 = vmatpush2.bf16.msra.mxu0 0
    %654 = vmatprep.subr.bf16.mxu0 0
    %655 = vmatpush2.bf16.msra.mxu0 0
    %656 = vmatprep.subr.bf16.mxu0 0
    %657 = vmatpush2.bf16.msra.mxu0 0
    %658 = vmatprep.subr.bf16.mxu0 0
    %659 = vmatpush2.bf16.msra.mxu0 0
    %660 = vmatprep.subr.bf16.mxu0 0
    %661 = vmatpush2.bf16.msra.mxu0 0
    %662 = vmatprep.subr.bf16.mxu0 0
    %663 = vmatpush2.bf16.msra.mxu0 0
    %664 = vmatprep.subr.bf16.mxu0 0
    %665 = vmatpush2.bf16.msra.mxu0 0
    %666 = vmatprep.subr.bf16.mxu0 0
    %667 = vmatpush2.bf16.msra.mxu0 0
    %668 = vmatprep.mubr.bf16.mxu0 0
    %669 = vmatmul.mubr.bf16.gmra.mxu0 %v625
    %v670 = vpop.f32.mrf.mxu0
    %v671 = vadd.f32 %v610, %v670
    %v672 = vpop.f32.mrf.mxu0
    %v673 = vpop.f32.mrf.mxu0
    %v674 = vadd.f32 %v610, %v673
    %v675 = vpop.f32.mrf.mxu0
    %676 = vmatprep.mubr.bf16.mxu0 0
    %677 = vmatmul.mubr.bf16.gmra.mxu0 %v628
    %v678 = vpop.f32.mrf.mxu0
    %v679 = vadd.f32 %v610, %v678
    %v680 = vpop.f32.mrf.mxu0
    %v681 = vpop.f32.mrf.mxu0
    %v682 = vadd.f32 %v610, %v681
    %v683 = vpop.f32.mrf.mxu0
    %684 = vmatprep.mubr.bf16.mxu0 0
    %685 = vmatmul.mubr.bf16.gmra.mxu0 %v631
    %v686 = vpop.f32.mrf.mxu0
    %v687 = vadd.f32 %v610, %v686
    %v688 = vpop.f32.mrf.mxu0
    %v689 = vpop.f32.mrf.mxu0
    %v690 = vadd.f32 %v610, %v689
    %v691 = vpop.f32.mrf.mxu0
    %692 = vmatprep.mubr.bf16.mxu0 0
    %693 = vmatmul.mubr.bf16.gmra.mxu0 %v634
    %v694 = vpop.f32.mrf.mxu0
    %v695 = vadd.f32 %v610, %v694
    %v696 = vpop.f32.mrf.mxu0
    %v697 = vpop.f32.mrf.mxu0
    %v698 = vadd.f32 %v610, %v697
    %v699 = vpop.f32.mrf.mxu0
    %700 = vdwg.mxu0
    %v705 = vunpack.c.l.b16 %v92
    %v706 = vunpack.c.l.b16 %v93
    %v707 = vunpack.c.l.b16 %v94
    %v708 = vunpack.c.l.b16 %v95
    %v709 = vpack.c.b16 %v706, %v705
    %v710 = vpack.c.b16 %v708, %v707
    %713 = vmatprep.subr.bf16.mxu0 0
    %714 = vmatpush1.bf16.msra.mxu0 0
    %715 = vmatprep.subr.bf16.mxu0 0
    %716 = vmatpush1.bf16.msra.mxu0 0
    %717 = vmatprep.subr.bf16.mxu0 0
    %718 = vmatpush1.bf16.msra.mxu0 0
    %719 = vmatprep.subr.bf16.mxu0 0
    %720 = vmatpush1.bf16.msra.mxu0 0
    %721 = vmatprep.subr.bf16.mxu0 0
    %722 = vmatpush1.bf16.msra.mxu0 0
    %723 = vmatprep.subr.bf16.mxu0 0
    %724 = vmatpush1.bf16.msra.mxu0 0
    %725 = vmatprep.subr.bf16.mxu0 0
    %726 = vmatpush1.bf16.msra.mxu0 %v710
    %727 = vmatprep.subr.bf16.mxu0 0
    %728 = vmatpush1.bf16.msra.mxu0 %v709
    %729 = vmatprep.subr.bf16.mxu0 0
    %730 = vmatpush2.bf16.msra.mxu0 0
    %731 = vmatprep.subr.bf16.mxu0 0
    %732 = vmatpush2.bf16.msra.mxu0 0
    %733 = vmatprep.subr.bf16.mxu0 0
    %734 = vmatpush2.bf16.msra.mxu0 0
    %735 = vmatprep.subr.bf16.mxu0 0
    %736 = vmatpush2.bf16.msra.mxu0 0
    %737 = vmatprep.subr.bf16.mxu0 0
    %738 = vmatpush2.bf16.msra.mxu0 0
    %739 = vmatprep.subr.bf16.mxu0 0
    %740 = vmatpush2.bf16.msra.mxu0 0
    %741 = vmatprep.subr.bf16.mxu0 0
    %742 = vmatpush2.bf16.msra.mxu0 0
    %743 = vmatprep.subr.bf16.mxu0 0
    %744 = vmatpush2.bf16.msra.mxu0 0
    %745 = vmatprep.mubr.bf16.mxu0 0
    %746 = vmatmul.mubr.bf16.gmra.mxu0 %v232
    %v747 = vpop.f32.mrf.mxu0
    %v748 = vadd.f32 0.0, %v747
    %v749 = vpop.f32.mrf.mxu0
    %v750 = vpop.f32.mrf.mxu0
    %v751 = vpop.f32.mrf.mxu0
    %752 = vdwg.mxu0
    %v753 = vadd.f32 %v671, %v748
    %v754 = vtanh.pop %v753
    %v755 = vpack.c.bf16 %v754, %v754
    %v757 = vsel %vm230, %v755, 0
    %759 = vmatprep.subr.bf16.mxu0 0
    %760 = vmatpush1.bf16.msra.mxu0 0
    %761 = vmatprep.subr.bf16.mxu0 0
    %762 = vmatpush1.bf16.msra.mxu0 0
    %763 = vmatprep.subr.bf16.mxu0 0
    %764 = vmatpush1.bf16.msra.mxu0 0
    %765 = vmatprep.subr.bf16.mxu0 0
    %766 = vmatpush1.bf16.msra.mxu0 0
    %767 = vmatprep.subr.bf16.mxu0 0
    %768 = vmatpush1.bf16.msra.mxu0 0
    %769 = vmatprep.subr.bf16.mxu0 0
    %770 = vmatpush1.bf16.msra.mxu0 0
    %771 = vmatprep.subr.bf16.mxu0 0
    %772 = vmatpush1.bf16.msra.mxu0 %v710
    %773 = vmatprep.subr.bf16.mxu0 0
    %774 = vmatpush1.bf16.msra.mxu0 %v709
    %775 = vmatprep.subr.bf16.mxu0 0
    %776 = vmatpush2.bf16.msra.mxu0 0
    %777 = vmatprep.subr.bf16.mxu0 0
    %778 = vmatpush2.bf16.msra.mxu0 0
    %779 = vmatprep.subr.bf16.mxu0 0
    %780 = vmatpush2.bf16.msra.mxu0 0
    %781 = vmatprep.subr.bf16.mxu0 0
    %782 = vmatpush2.bf16.msra.mxu0 0
    %783 = vmatprep.subr.bf16.mxu0 0
    %784 = vmatpush2.bf16.msra.mxu0 0
    %785 = vmatprep.subr.bf16.mxu0 0
    %786 = vmatpush2.bf16.msra.mxu0 0
    %787 = vmatprep.subr.bf16.mxu0 0
    %788 = vmatpush2.bf16.msra.mxu0 0
    %789 = vmatprep.subr.bf16.mxu0 0
    %790 = vmatpush2.bf16.msra.mxu0 0
    %791 = vmatprep.mubr.bf16.mxu0 0
    %792 = vmatmul.mubr.bf16.gmra.mxu0 %v757
    %v793 = vpop.f32.mrf.mxu0
    %v794 = vadd.f32 0.0, %v793
    %v795 = vpop.f32.mrf.mxu0
    %v796 = vpop.f32.mrf.mxu0
    %v797 = vpop.f32.mrf.mxu0
    %798 = vdwg.mxu0
    %v799 = vadd.f32 %v674, %v794
    %v800 = vtanh.pop %v799
    %v801 = vpack.c.bf16 %v800, %v800
    %v803 = vsel %vm230, %v801, 0
    %805 = vmatprep.subr.bf16.mxu0 0
    %806 = vmatpush1.bf16.msra.mxu0 0
    %807 = vmatprep.subr.bf16.mxu0 0
    %808 = vmatpush1.bf16.msra.mxu0 0
    %809 = vmatprep.subr.bf16.mxu0 0
    %810 = vmatpush1.bf16.msra.mxu0 0
    %811 = vmatprep.subr.bf16.mxu0 0
    %812 = vmatpush1.bf16.msra.mxu0 0
    %813 = vmatprep.subr.bf16.mxu0 0
    %814 = vmatpush1.bf16.msra.mxu0 0
    %815 = vmatprep.subr.bf16.mxu0 0
    %816 = vmatpush1.bf16.msra.mxu0 0
    %817 = vmatprep.subr.bf16.mxu0 0
    %818 = vmatpush1.bf16.msra.mxu0 %v710
    %819 = vmatprep.subr.bf16.mxu0 0
    %820 = vmatpush1.bf16.msra.mxu0 %v709
    %821 = vmatprep.subr.bf16.mxu0 0
    %822 = vmatpush2.bf16.msra.mxu0 0
    %823 = vmatprep.subr.bf16.mxu0 0
    %824 = vmatpush2.bf16.msra.mxu0 0
    %825 = vmatprep.subr.bf16.mxu0 0
    %826 = vmatpush2.bf16.msra.mxu0 0
    %827 = vmatprep.subr.bf16.mxu0 0
    %828 = vmatpush2.bf16.msra.mxu0 0
    %829 = vmatprep.subr.bf16.mxu0 0
    %830 = vmatpush2.bf16.msra.mxu0 0
    %831 = vmatprep.subr.bf16.mxu0 0
    %832 = vmatpush2.bf16.msra.mxu0 0
    %833 = vmatprep.subr.bf16.mxu0 0
    %834 = vmatpush2.bf16.msra.mxu0 0
    %835 = vmatprep.subr.bf16.mxu0 0
    %836 = vmatpush2.bf16.msra.mxu0 0
    %837 = vmatprep.mubr.bf16.mxu0 0
    %838 = vmatmul.mubr.bf16.gmra.mxu0 %v803
    %v839 = vpop.f32.mrf.mxu0
    %v840 = vadd.f32 0.0, %v839
    %v841 = vpop.f32.mrf.mxu0
    %v842 = vpop.f32.mrf.mxu0
    %v843 = vpop.f32.mrf.mxu0
    %844 = vdwg.mxu0
    %v845 = vadd.f32 %v679, %v840
    %v846 = vtanh.pop %v845
    %v847 = vpack.c.bf16 %v846, %v846
    %v849 = vsel %vm230, %v847, 0
    %851 = vmatprep.subr.bf16.mxu0 0
    %852 = vmatpush1.bf16.msra.mxu0 0
    %853 = vmatprep.subr.bf16.mxu0 0
    %854 = vmatpush1.bf16.msra.mxu0 0
    %855 = vmatprep.subr.bf16.mxu0 0
    %856 = vmatpush1.bf16.msra.mxu0 0
    %857 = vmatprep.subr.bf16.mxu0 0
    %858 = vmatpush1.bf16.msra.mxu0 0
    %859 = vmatprep.subr.bf16.mxu0 0
    %860 = vmatpush1.bf16.msra.mxu0 0
    %861 = vmatprep.subr.bf16.mxu0 0
    %862 = vmatpush1.bf16.msra.mxu0 0
    %863 = vmatprep.subr.bf16.mxu0 0
    %864 = vmatpush1.bf16.msra.mxu0 %v710
    %865 = vmatprep.subr.bf16.mxu0 0
    %866 = vmatpush1.bf16.msra.mxu0 %v709
    %867 = vmatprep.subr.bf16.mxu0 0
    %868 = vmatpush2.bf16.msra.mxu0 0
    %869 = vmatprep.subr.bf16.mxu0 0
    %870 = vmatpush2.bf16.msra.mxu0 0
    %871 = vmatprep.subr.bf16.mxu0 0
    %872 = vmatpush2.bf16.msra.mxu0 0
    %873 = vmatprep.subr.bf16.mxu0 0
    %874 = vmatpush2.bf16.msra.mxu0 0
    %875 = vmatprep.subr.bf16.mxu0 0
    %876 = vmatpush2.bf16.msra.mxu0 0
    %877 = vmatprep.subr.bf16.mxu0 0
    %878 = vmatpush2.bf16.msra.mxu0 0
    %879 = vmatprep.subr.bf16.mxu0 0
    %880 = vmatpush2.bf16.msra.mxu0 0
    %881 = vmatprep.subr.bf16.mxu0 0
    %882 = vmatpush2.bf16.msra.mxu0 0
    %883 = vmatprep.mubr.bf16.mxu0 0
    %884 = vmatmul.mubr.bf16.gmra.mxu0 %v849
    %v885 = vpop.f32.mrf.mxu0
    %v886 = vadd.f32 0.0, %v885
    %v887 = vpop.f32.mrf.mxu0
    %v888 = vpop.f32.mrf.mxu0
    %v889 = vpop.f32.mrf.mxu0
    %890 = vdwg.mxu0
    %v891 = vadd.f32 %v682, %v886
    %v892 = vtanh.pop %v891
    %v893 = vpack.c.bf16 %v892, %v892
    %v895 = vsel %vm230, %v893, 0
    %897 = vmatprep.subr.bf16.mxu0 0
    %898 = vmatpush1.bf16.msra.mxu0 0
    %899 = vmatprep.subr.bf16.mxu0 0
    %900 = vmatpush1.bf16.msra.mxu0 0
    %901 = vmatprep.subr.bf16.mxu0 0
    %902 = vmatpush1.bf16.msra.mxu0 0
    %903 = vmatprep.subr.bf16.mxu0 0
    %904 = vmatpush1.bf16.msra.mxu0 0
    %905 = vmatprep.subr.bf16.mxu0 0
    %906 = vmatpush1.bf16.msra.mxu0 0
    %907 = vmatprep.subr.bf16.mxu0 0
    %908 = vmatpush1.bf16.msra.mxu0 0
    %909 = vmatprep.subr.bf16.mxu0 0
    %910 = vmatpush1.bf16.msra.mxu0 %v710
    %911 = vmatprep.subr.bf16.mxu0 0
    %912 = vmatpush1.bf16.msra.mxu0 %v709
    %913 = vmatprep.subr.bf16.mxu0 0
    %914 = vmatpush2.bf16.msra.mxu0 0
    %915 = vmatprep.subr.bf16.mxu0 0
    %916 = vmatpush2.bf16.msra.mxu0 0
    %917 = vmatprep.subr.bf16.mxu0 0
    %918 = vmatpush2.bf16.msra.mxu0 0
    %919 = vmatprep.subr.bf16.mxu0 0
    %920 = vmatpush2.bf16.msra.mxu0 0
    %921 = vmatprep.subr.bf16.mxu0 0
    %922 = vmatpush2.bf16.msra.mxu0 0
    %923 = vmatprep.subr.bf16.mxu0 0
    %924 = vmatpush2.bf16.msra.mxu0 0
    %925 = vmatprep.subr.bf16.mxu0 0
    %926 = vmatpush2.bf16.msra.mxu0 0
    %927 = vmatprep.subr.bf16.mxu0 0
    %928 = vmatpush2.bf16.msra.mxu0 0
    %929 = vmatprep.mubr.bf16.mxu0 0
    %930 = vmatmul.mubr.bf16.gmra.mxu0 %v895
    %v931 = vpop.f32.mrf.mxu0
    %v932 = vadd.f32 0.0, %v931
    %v933 = vpop.f32.mrf.mxu0
    %v934 = vpop.f32.mrf.mxu0
    %v935 = vpop.f32.mrf.mxu0
    %936 = vdwg.mxu0
    %v937 = vadd.f32 %v687, %v932
    %v938 = vtanh.pop %v937
    %v939 = vpack.c.bf16 %v938, %v938
    %v941 = vsel %vm230, %v939, 0
    %943 = vmatprep.subr.bf16.mxu0 0
    %944 = vmatpush1.bf16.msra.mxu0 0
    %945 = vmatprep.subr.bf16.mxu0 0
    %946 = vmatpush1.bf16.msra.mxu0 0
    %947 = vmatprep.subr.bf16.mxu0 0
    %948 = vmatpush1.bf16.msra.mxu0 0
    %949 = vmatprep.subr.bf16.mxu0 0
    %950 = vmatpush1.bf16.msra.mxu0 0
    %951 = vmatprep.subr.bf16.mxu0 0
    %952 = vmatpush1.bf16.msra.mxu0 0
    %953 = vmatprep.subr.bf16.mxu0 0
    %954 = vmatpush1.bf16.msra.mxu0 0
    %955 = vmatprep.subr.bf16.mxu0 0
    %956 = vmatpush1.bf16.msra.mxu0 %v710
    %957 = vmatprep.subr.bf16.mxu0 0
    %958 = vmatpush1.bf16.msra.mxu0 %v709
    %959 = vmatprep.subr.bf16.mxu0 0
    %960 = vmatpush2.bf16.msra.mxu0 0
    %961 = vmatprep.subr.bf16.mxu0 0
    %962 = vmatpush2.bf16.msra.mxu0 0
    %963 = vmatprep.subr.bf16.mxu0 0
    %964 = vmatpush2.bf16.msra.mxu0 0
    %965 = vmatprep.subr.bf16.mxu0 0
    %966 = vmatpush2.bf16.msra.mxu0 0
    %967 = vmatprep.subr.bf16.mxu0 0
    %968 = vmatpush2.bf16.msra.mxu0 0
    %969 = vmatprep.subr.bf16.mxu0 0
    %970 = vmatpush2.bf16.msra.mxu0 0
    %971 = vmatprep.subr.bf16.mxu0 0
    %972 = vmatpush2.bf16.msra.mxu0 0
    %973 = vmatprep.subr.bf16.mxu0 0
    %974 = vmatpush2.bf16.msra.mxu0 0
    %975 = vmatprep.mubr.bf16.mxu0 0
    %976 = vmatmul.mubr.bf16.gmra.mxu0 %v941
    %v977 = vpop.f32.mrf.mxu0
    %v978 = vadd.f32 0.0, %v977
    %v979 = vpop.f32.mrf.mxu0
    %v980 = vpop.f32.mrf.mxu0
    %v981 = vpop.f32.mrf.mxu0
    %982 = vdwg.mxu0
    %v983 = vadd.f32 %v690, %v978
    %v984 = vtanh.pop %v983
    %v985 = vpack.c.bf16 %v984, %v984
    %v987 = vsel %vm230, %v985, 0
    %989 = vmatprep.subr.bf16.mxu0 0
    %990 = vmatpush1.bf16.msra.mxu0 0
    %991 = vmatprep.subr.bf16.mxu0 0
    %992 = vmatpush1.bf16.msra.mxu0 0
    %993 = vmatprep.subr.bf16.mxu0 0
    %994 = vmatpush1.bf16.msra.mxu0 0
    %995 = vmatprep.subr.bf16.mxu0 0
    %996 = vmatpush1.bf16.msra.mxu0 0
    %997 = vmatprep.subr.bf16.mxu0 0
    %998 = vmatpush1.bf16.msra.mxu0 0
    %999 = vmatprep.subr.bf16.mxu0 0
    %1000 = vmatpush1.bf16.msra.mxu0 0
    %1001 = vmatprep.subr.bf16.mxu0 0
    %1002 = vmatpush1.bf16.msra.mxu0 %v710
    %1003 = vmatprep.subr.bf16.mxu0 0
    %1004 = vmatpush1.bf16.msra.mxu0 %v709
    %1005 = vmatprep.subr.bf16.mxu0 0
    %1006 = vmatpush2.bf16.msra.mxu0 0
    %1007 = vmatprep.subr.bf16.mxu0 0
    %1008 = vmatpush2.bf16.msra.mxu0 0
    %1009 = vmatprep.subr.bf16.mxu0 0
    %1010 = vmatpush2.bf16.msra.mxu0 0
    %1011 = vmatprep.subr.bf16.mxu0 0
    %1012 = vmatpush2.bf16.msra.mxu0 0
    %1013 = vmatprep.subr.bf16.mxu0 0
    %1014 = vmatpush2.bf16.msra.mxu0 0
    %1015 = vmatprep.subr.bf16.mxu0 0
    %1016 = vmatpush2.bf16.msra.mxu0 0
    %1017 = vmatprep.subr.bf16.mxu0 0
    %1018 = vmatpush2.bf16.msra.mxu0 0
    %1019 = vmatprep.subr.bf16.mxu0 0
    %1020 = vmatpush2.bf16.msra.mxu0 0
    %1021 = vmatprep.mubr.bf16.mxu0 0
    %1022 = vmatmul.mubr.bf16.gmra.mxu0 %v987
    %v1023 = vpop.f32.mrf.mxu0
    %v1024 = vadd.f32 0.0, %v1023
    %v1025 = vpop.f32.mrf.mxu0
    %v1026 = vpop.f32.mrf.mxu0
    %v1027 = vpop.f32.mrf.mxu0
    %1028 = vdwg.mxu0
    %v1029 = vadd.f32 %v695, %v1024
    %v1030 = vtanh.pop %v1029
    %v1031 = vpack.c.bf16 %v1030, %v1030
    %v1033 = vsel %vm230, %v1031, 0
    %1035 = vmatprep.subr.bf16.mxu0 0
    %1036 = vmatpush1.bf16.msra.mxu0 0
    %1037 = vmatprep.subr.bf16.mxu0 0
    %1038 = vmatpush1.bf16.msra.mxu0 0
    %1039 = vmatprep.subr.bf16.mxu0 0
    %1040 = vmatpush1.bf16.msra.mxu0 0
    %1041 = vmatprep.subr.bf16.mxu0 0
    %1042 = vmatpush1.bf16.msra.mxu0 0
    %1043 = vmatprep.subr.bf16.mxu0 0
    %1044 = vmatpush1.bf16.msra.mxu0 0
    %1045 = vmatprep.subr.bf16.mxu0 0
    %1046 = vmatpush1.bf16.msra.mxu0 0
    %1047 = vmatprep.subr.bf16.mxu0 0
    %1048 = vmatpush1.bf16.msra.mxu0 %v710
    %1049 = vmatprep.subr.bf16.mxu0 0
    %1050 = vmatpush1.bf16.msra.mxu0 %v709
    %1051 = vmatprep.subr.bf16.mxu0 0
    %1052 = vmatpush2.bf16.msra.mxu0 0
    %1053 = vmatprep.subr.bf16.mxu0 0
    %1054 = vmatpush2.bf16.msra.mxu0 0
    %1055 = vmatprep.subr.bf16.mxu0 0
    %1056 = vmatpush2.bf16.msra.mxu0 0
    %1057 = vmatprep.subr.bf16.mxu0 0
    %1058 = vmatpush2.bf16.msra.mxu0 0
    %1059 = vmatprep.subr.bf16.mxu0 0
    %1060 = vmatpush2.bf16.msra.mxu0 0
    %1061 = vmatprep.subr.bf16.mxu0 0
    %1062 = vmatpush2.bf16.msra.mxu0 0
    %1063 = vmatprep.subr.bf16.mxu0 0
    %1064 = vmatpush2.bf16.msra.mxu0 0
    %1065 = vmatprep.subr.bf16.mxu0 0
    %1066 = vmatpush2.bf16.msra.mxu0 0
    %1067 = vmatprep.mubr.bf16.mxu0 0
    %1068 = vmatmul.mubr.bf16.gmra.mxu0 %v1033
    %v1069 = vpop.f32.mrf.mxu0
    %v1070 = vadd.f32 0.0, %v1069
    %v1071 = vpop.f32.mrf.mxu0
    %v1072 = vpop.f32.mrf.mxu0
    %v1073 = vpop.f32.mrf.mxu0
    %1074 = vdwg.mxu0
    %v1075 = vadd.f32 %v698, %v1070
    %v1076 = vtanh.pop %v1075
    %v1077 = vpack.c.bf16 %v1076, %v1076
    %v1078 = vld [vmem:[%s7] sm:$0xf]
    %v1079 = vld [vmem:[%s7 + $0x4] sm:$0xf]
    %v1080 = vld [vmem:[%s7 + $0x8] sm:$0xf]
    %v1081 = vld [vmem:[%s7 + $0xc] sm:$0xf]
    %v1082 = vld [vmem:[%s8] sm:$0x1]
    %v1084 = vlaneseq
    %v1085 = vshrl.u32 %v1084, 7
    %v1086 = vsub.s32 0, %v1085
    %v1087 = vrot.slane %v1082, %v1086
    %v1093 = vunpack.c.l.b16 %v1078
    %v1094 = vunpack.c.l.b16 %v1079
    %v1095 = vunpack.c.l.b16 %v1080
    %v1096 = vunpack.c.l.b16 %v1081
    %v1097 = vpack.c.b16 %v1094, %v1093
    %v1098 = vpack.c.b16 %v1096, %v1095
    %v1102 = vsel %vm230, %v1077, 0
    %1104 = vmatprep.subr.bf16.mxu0 0
    %1105 = vmatpush1.bf16.msra.mxu0 0
    %1106 = vmatprep.subr.bf16.mxu0 0
    %1107 = vmatpush1.bf16.msra.mxu0 0
    %1108 = vmatprep.subr.bf16.mxu0 0
    %1109 = vmatpush1.bf16.msra.mxu0 0
    %1110 = vmatprep.subr.bf16.mxu0 0
    %1111 = vmatpush1.bf16.msra.mxu0 0
    %1112 = vmatprep.subr.bf16.mxu0 0
    %1113 = vmatpush1.bf16.msra.mxu0 0
    %1114 = vmatprep.subr.bf16.mxu0 0
    %1115 = vmatpush1.bf16.msra.mxu0 0
    %1116 = vmatprep.subr.bf16.mxu0 0
    %1117 = vmatpush1.bf16.msra.mxu0 %v1098
    %1118 = vmatprep.subr.bf16.mxu0 0
    %1119 = vmatpush1.bf16.msra.mxu0 %v1097
    %1120 = vmatprep.subr.bf16.mxu0 0
    %1121 = vmatpush2.bf16.msra.mxu0 0
    %1122 = vmatprep.subr.bf16.mxu0 0
    %1123 = vmatpush2.bf16.msra.mxu0 0
    %1124 = vmatprep.subr.bf16.mxu0 0
    %1125 = vmatpush2.bf16.msra.mxu0 0
    %1126 = vmatprep.subr.bf16.mxu0 0
    %1127 = vmatpush2.bf16.msra.mxu0 0
    %1128 = vmatprep.subr.bf16.mxu0 0
    %1129 = vmatpush2.bf16.msra.mxu0 0
    %1130 = vmatprep.subr.bf16.mxu0 0
    %1131 = vmatpush2.bf16.msra.mxu0 0
    %1132 = vmatprep.subr.bf16.mxu0 0
    %1133 = vmatpush2.bf16.msra.mxu0 0
    %1134 = vmatprep.subr.bf16.mxu0 0
    %1135 = vmatpush2.bf16.msra.mxu0 0
    %1136 = vmatprep.mubr.bf16.mxu0 0
    %1137 = vmatmul.mubr.bf16.gmra.mxu0 %v1102
    %v1138 = vpop.f32.mrf.mxu0
    %v1139 = vadd.f32 %v1087, %v1138
    %v1140 = vpop.f32.mrf.mxu0
    %v1141 = vpop.f32.mrf.mxu0
    %v1142 = vpop.f32.mrf.mxu0
    %1143 = vdwg.mxu0
    %vm1144 = vcmask 31744
    %1145 = vst.msk [vmem:[%s9] sm:$0xff] %vm1144, %v1139
    // Predicated region
    $region54: #{tpu_custom_call.1} parent=1 // pred_check
      _
    $region55: #{tpu_custom_call.1} parent=1 // pred_check_branch
      %1147 = sbr.rel (0) target = $region57
    $region56: #{tpu_custom_call.1} parent=1 // pred_region
      _
    $region57: #{tpu_custom_call.1} parent=1 // pred_fallthru
      _
    // Predicated region
    $region58: #{tpu_custom_call.1} parent=1 // pred_check
      _
    $region59: #{tpu_custom_call.1} parent=1 // pred_check_branch
      %1149 = sbr.rel (0) target = $region61
    $region60: #{tpu_custom_call.1} parent=1 // pred_region
      _
    $region61: #{tpu_custom_call.1} parent=1 // pred_fallthru
      _
    %1150 = vsyncpa [#allocation3], 1
    %1151 = vsyncpa [#allocation5], 1
    %1152 = vsyncpa [#allocation8], 1

</llo_original>
